<compile_context>
chip_gen: v7x
topology: tpu7x:2x2x1
jax: 0.10.0
libtpu: 0.0.40
codegen_flags: <defaults>
</compile_context>

<pallas_src>
import functools

import jax
import jax.numpy as jnp
from jax.experimental import pallas as pl
from jax.experimental.pallas import tpu as pltpu


def _round_up(v, m):
    return ((v + m - 1) // m) * m


def _dilated_conv1d_kernel(shift, precision, x_lo_ref, x_hi_ref, w_ref, o_ref,
                           *scratch):
    """One (batch, time-tile) step.

    x_lo_ref : (1, C, TL)   input columns [j*TL, (j+1)*TL)
    x_hi_ref : (1, C, TLB)  input columns [(j+1)*TL, (j+1)*TL + TLB)
    w_ref    : (2, C, C)    tap-major weights (w[k] = W[:, :, k])
    o_ref    : (1, C, TL)   output columns [j*TL, (j+1)*TL)
    scratch  : optional (C, TL) VMEM tile for the shifted operand (shift > 0)
    """
    x0 = x_lo_ref[0]                      # (C, TL)
    hi = x_hi_ref[0]                      # (C, TLB)
    w0 = w_ref[0]
    w1 = w_ref[1]

    acc = jnp.dot(w0, x0, preferred_element_type=jnp.float32,
                  precision=precision)

    if shift == 0:
        # dilation == TL: the shifted tap is exactly the next (aligned) block.
        x1 = hi
    else:
        # Assemble x[:, t + d] for this tile from the two lane-aligned DMA'd
        # blocks using static slices into a VMEM scratch tile.
        tl = x0.shape[-1]
        x1_ref = scratch[0]
        x1_ref[:, : tl - shift] = x0[:, shift:]
        x1_ref[:, tl - shift:] = hi[:, :shift]
        x1 = x1_ref[...]

    acc = acc + jnp.dot(w1, x1, preferred_element_type=jnp.float32,
                        precision=precision)
    o_ref[0] = acc.astype(o_ref.dtype)


def dilated_conv1d(x, weight, dilation, *, compute_dtype=None, out_dtype=None,
                   time_tile=None):
    """x: (N, C, L), weight: (C, C, 2) -> (N, C, L - dilation).

    compute_dtype: optionally cast x/weight (e.g. jnp.bfloat16) before the
                   kernel; accumulation is always f32.
    time_tile:     optional lane-tile override (rounded to the required
                   multiple of 128 / round_up(dilation, 128)).
    """
    n, c, l = x.shape
    c_out, c_in, k = weight.shape
    assert k == 2 and c_in == c and c_out == c, "expects Conv1d(C, C, k=2)"
    dilation = int(dilation)
    l_out = l - dilation
    assert l_out > 0, "input too short for this dilation"

    if out_dtype is None:
        out_dtype = x.dtype
    if compute_dtype is not None and x.dtype != compute_dtype:
        x = x.astype(compute_dtype)
        weight = weight.astype(compute_dtype)

    # Weights as one (2, C, C) tap-major array (single resident VMEM block).
    w = jnp.transpose(weight, (2, 0, 1))

    # ---- tile selection -----------------------------------------------------
    # TLB: width of the "spill over" block of the next tile (>= dilation,
    # multiple of 128).  TL: main time tile, a multiple of TLB so the spill
    # block offset is expressible with block indices.
    tlb = _round_up(max(dilation, 1), 128)
    if time_tile is not None:
        tl = _round_up(max(int(time_tile), tlb), tlb)
    else:
        tl = _round_up(min(1024, _round_up(l_out, 128)), tlb)
        tl = max(tl, tlb)

    ratio = tl // tlb
    t_tiles = pl.cdiv(l_out, tl)
    nbx_hi = pl.cdiv(l, tlb)              # number of TLB-blocks along time of x
    shift = dilation % tl                 # 0 iff dilation == tl

    precision = jax.lax.Precision.HIGHEST if x.dtype == jnp.float32 else None
    kernel = functools.partial(_dilated_conv1d_kernel, shift, precision)

    scratch_shapes = []
    if shift:
        scratch_shapes.append(pltpu.VMEM((c, tl), x.dtype))

    def lo_map(b, j):
        return (b, 0, j)

    def hi_map(b, j):
        # First TLB columns of the *next* TL-tile; clamped index is only hit
        # when those columns are never needed (they land in masked output).
        return (b, 0, jnp.minimum((j + 1) * ratio, nbx_hi - 1))

    def w_map(b, j):
        return (0, 0, 0)

    def out_map(b, j):
        return (b, 0, j)

    # ---- VMEM budget (double-buffered blocks + scratch + f32 temporaries) ---
    in_b = jnp.dtype(x.dtype).itemsize
    out_b = jnp.dtype(out_dtype).itemsize
    est = (2 * c * tl * in_b          # lo input, double buffered
           + 2 * c * tlb * in_b       # spill input, double buffered
           + 2 * c * tl * out_b       # output, double buffered
           + 2 * 2 * c * c * in_b     # weights
           + (c * tl * in_b if shift else 0)
           + 2 * c * tl * 4)          # f32 accumulator temporaries
    vmem_limit = int(min(max(2 * est, 32 * 1024 * 1024), 64 * 1024 * 1024))

    return pl.pallas_call(
        kernel,
        out_shape=jax.ShapeDtypeStruct((n, c, l_out), out_dtype),
        grid_spec=pltpu.PrefetchScalarGridSpec(
            num_scalar_prefetch=0,
            grid=(n, t_tiles),
            in_specs=[
                pl.BlockSpec((1, c, tl), lo_map),
                pl.BlockSpec((1, c, tlb), hi_map),
                pl.BlockSpec((2, c, c), w_map),
            ],
            out_specs=pl.BlockSpec((1, c, tl), out_map),
            scratch_shapes=tuple(scratch_shapes),
        ),
        compiler_params=pltpu.CompilerParams(
            dimension_semantics=("parallel", "parallel"),
            vmem_limit_bytes=vmem_limit,
        ),
    )(x, x, w)


def _reference(x, weight, dilation):
    """Plain-JAX reference (matches PyTorch Conv1d(k=2, bias=False))."""
    l_out = x.shape[-1] - dilation
    hp = jax.lax.Precision.HIGHEST
    w0 = weight[:, :, 0]
    w1 = weight[:, :, 1]
    return (jnp.einsum("oc,ncl->nol", w0, x[:, :, :l_out], precision=hp)
            + jnp.einsum("oc,ncl->nol", w1,
                         x[:, :, dilation:dilation + l_out], precision=hp))


if __name__ == "__main__":
    key = jax.random.PRNGKey(0)
    k1, k2, k3, k4 = jax.random.split(key, 4)

    # Test 1: the module's small shape, f32 end-to-end, strict check.
    N, C, L, D = 2, 4, 16, 2
    x = jax.random.normal(k1, (N, C, L), dtype=jnp.float32)
    w = jax.random.normal(k2, (C, C, 2), dtype=jnp.float32) * 0.1
    out = jax.block_until_ready(dilated_conv1d(x, w, D))
    ref = _reference(x, w, D)
    assert out.shape == (N, C, L - D)
    assert jnp.allclose(out, ref, atol=1e-5, rtol=1e-5)

    # Test 2: forced 128-lane tiles -> multiple time tiles, exercises the
    # cross-tile shifted window (spill block) and the ragged last tile.
    N2, C2, L2, D2 = 2, 8, 400, 4
    x2 = jax.random.normal(k3, (N2, C2, L2), dtype=jnp.float32)
    w2 = jax.random.normal(k4, (C2, C2, 2), dtype=jnp.float32) * 0.1
    out2 = jax.block_until_ready(dilated_conv1d(x2, w2, D2, time_tile=128))
    ref2 = _reference(x2, w2, D2)
    assert out2.shape == (N2, C2, L2 - D2)
    assert jnp.allclose(out2, ref2, atol=1e-4, rtol=1e-4)

    # Test 3: bf16 I/O path (halved HBM traffic, f32 accumulation), loose check.
    out3 = jax.block_until_ready(
        dilated_conv1d(x2, w2, D2, time_tile=128, compute_dtype=jnp.bfloat16))
    assert jnp.allclose(out3.astype(jnp.float32), ref2, atol=1e-1, rtol=1e-1)

    print("KERNEL_OK")
</pallas_src>

<mosaic_0001>
module attributes {stable_mosaic.version = 11 : i64} {
  func.func @_dilated_conv1d_kernel(%arg0: i32, %arg1: i32, %arg2: memref<1x4x128xf32, #tpu.memory_space<vmem>>, %arg3: memref<1x4x128xf32, #tpu.memory_space<vmem>>, %arg4: memref<2x4x4xf32, #tpu.memory_space<vmem>>, %arg5: memref<1x4x128xf32, #tpu.memory_space<vmem>>, %arg6: memref<4x128xf32, #tpu.memory_space<vmem>>) attributes {dimension_semantics = [#tpu.dimension_semantics<parallel>, #tpu.dimension_semantics<parallel>], iteration_bounds = array<i64: 2, 1>, scalar_prefetch = 0 : i64, scratch_operands = 1 : i64, tpu.core_type = #tpu.core_type<tc>, window_params = [{transform_indices = @transform_0, window_bounds = array<i64: 1, 4, 128>}, {transform_indices = @transform_1, window_bounds = array<i64: 1, 4, 128>}, {pipeline_mode = #tpu.pipeline_mode<synchronous>, transform_indices = @transform_2, window_bounds = array<i64: 2, 4, 4>}, {transform_indices = @transform_3, window_bounds = array<i64: 1, 4, 128>}]} {
    %c0 = arith.constant 0 : index
    %c0_0 = arith.constant 0 : index
    %c0_1 = arith.constant 0 : index
    %0 = vector.load %arg2[%c0, %c0_0, %c0_1] : memref<1x4x128xf32, #tpu.memory_space<vmem>>, vector<1x4x128xf32>
    %1 = vector.shape_cast %0 : vector<1x4x128xf32> to vector<4x128xf32>
    %c0_2 = arith.constant 0 : index
    %c0_3 = arith.constant 0 : index
    %c0_4 = arith.constant 0 : index
    %2 = vector.load %arg3[%c0_2, %c0_3, %c0_4] : memref<1x4x128xf32, #tpu.memory_space<vmem>>, vector<1x4x128xf32>
    %3 = vector.shape_cast %2 : vector<1x4x128xf32> to vector<4x128xf32>
    %c0_5 = arith.constant 0 : index
    %c0_6 = arith.constant 0 : index
    %c0_7 = arith.constant 0 : index
    %4 = vector.load %arg4[%c0_5, %c0_6, %c0_7] : memref<2x4x4xf32, #tpu.memory_space<vmem>>, vector<1x4x4xf32>
    %5 = vector.shape_cast %4 : vector<1x4x4xf32> to vector<4x4xf32>
    %c1 = arith.constant 1 : index
    %c0_8 = arith.constant 0 : index
    %c0_9 = arith.constant 0 : index
    %6 = vector.load %arg4[%c1, %c0_8, %c0_9] : memref<2x4x4xf32, #tpu.memory_space<vmem>>, vector<1x4x4xf32>
    %7 = vector.shape_cast %6 : vector<1x4x4xf32> to vector<4x4xf32>
    %cst = arith.constant dense<0.000000e+00> : vector<4x128xf32>
    %8 = tpu.matmul %5, %1, %cst {dimension_numbers = #tpu.dot_dimension_numbers<[1], [0], [0], [1], [0, 0, 1, 1], [], []>, precision = #tpu.contract_precision<fp32>} : vector<4x4xf32>, vector<4x128xf32>, vector<4x128xf32> -> vector<4x128xf32>
    %9 = vector.extract_strided_slice %1 {offsets = [0, 2], sizes = [4, 126], strides = [1, 1]} : vector<4x128xf32> to vector<4x126xf32>
    %c0_10 = arith.constant 0 : index
    %c0_11 = arith.constant 0 : index
    %10 = vector.load %arg6[%c0_10, %c0_11] : memref<4x128xf32, #tpu.memory_space<vmem>>, vector<4x126xf32>
    tpu.vector_store %arg6[%c0_10, %c0_11], %9 {strides = array<i32>} : memref<4x128xf32, #tpu.memory_space<vmem>>, vector<4x126xf32>,
    %11 = vector.extract_strided_slice %3 {offsets = [0, 0], sizes = [4, 2], strides = [1, 1]} : vector<4x128xf32> to vector<4x2xf32>
    %c0_12 = arith.constant 0 : index
    %c126 = arith.constant 126 : index
    %12 = vector.load %arg6[%c0_12, %c126] : memref<4x128xf32, #tpu.memory_space<vmem>>, vector<4x2xf32>
    tpu.vector_store %arg6[%c0_12, %c126], %11 {strides = array<i32>} : memref<4x128xf32, #tpu.memory_space<vmem>>, vector<4x2xf32>,
    %c0_13 = arith.constant 0 : index
    %c0_14 = arith.constant 0 : index
    %13 = vector.load %arg6[%c0_13, %c0_14] : memref<4x128xf32, #tpu.memory_space<vmem>>, vector<4x128xf32>
    %cst_15 = arith.constant dense<0.000000e+00> : vector<4x128xf32>
    %14 = tpu.matmul %7, %13, %cst_15 {dimension_numbers = #tpu.dot_dimension_numbers<[1], [0], [0], [1], [0, 0, 1, 1], [], []>, precision = #tpu.contract_precision<fp32>} : vector<4x4xf32>, vector<4x128xf32>, vector<4x128xf32> -> vector<4x128xf32>
    %15 = arith.addf %8, %14 : vector<4x128xf32>
    %c0_16 = arith.constant 0 : index
    %c0_17 = arith.constant 0 : index
    %c0_18 = arith.constant 0 : index
    %16 = vector.load %arg5[%c0_16, %c0_17, %c0_18] : memref<1x4x128xf32, #tpu.memory_space<vmem>>, vector<1x4x128xf32>
    %17 = vector.shape_cast %16 : vector<1x4x128xf32> to vector<4x128xf32>
    %18 = vector.shape_cast %15 : vector<4x128xf32> to vector<1x4x128xf32>
    tpu.vector_store %arg5[%c0_16, %c0_17, %c0_18], %18 {strides = array<i32>} : memref<1x4x128xf32, #tpu.memory_space<vmem>>, vector<1x4x128xf32>,
    return
  }
  func.func @transform_0(%arg0: i32, %arg1: i32) -> (i32, i32, i32) {
    %c0_i32 = arith.constant 0 : i32
    %c0_i32_0 = arith.constant 0 : i32
    return %arg0, %c0_i32, %arg1 : i32, i32, i32
  }
  func.func @transform_1(%arg0: i32, %arg1: i32) -> (i32, i32, i32) {
    %c1_i32 = arith.constant 1 : i32
    %0 = arith.addi %arg1, %c1_i32 : i32
    %c1_i32_0 = arith.constant 1 : i32
    %1 = arith.muli %0, %c1_i32_0 : i32
    %c0_i32 = arith.constant 0 : i32
    %2 = arith.minsi %1, %c0_i32 : i32
    %c0_i32_1 = arith.constant 0 : i32
    %c0_i32_2 = arith.constant 0 : i32
    return %arg0, %c0_i32_1, %2 : i32, i32, i32
  }
  func.func @transform_2(%arg0: i32, %arg1: i32) -> (i32, i32, i32) {
    %c0_i32 = arith.constant 0 : i32
    %c0_i32_0 = arith.constant 0 : i32
    %c0_i32_1 = arith.constant 0 : i32
    %c0_i32_2 = arith.constant 0 : i32
    return %c0_i32, %c0_i32_0, %c0_i32_1 : i32, i32, i32
  }
  func.func @transform_3(%arg0: i32, %arg1: i32) -> (i32, i32, i32) {
    %c0_i32 = arith.constant 0 : i32
    %c0_i32_0 = arith.constant 0 : i32
    return %arg0, %c0_i32, %arg1 : i32, i32, i32
  }
}

</mosaic_0001>

<llo_original>
// kernel: tpu_custom_call.1
$region0: #{tpu_custom_call.1}
  #allocation0 [shape = 'u32[]', space=smem, size = 0x4, offset = 0x4, fixed_abs, tag = 'smem constant byte address 0x4 - core index']
  #allocation1 [shape = 'u32[144,128]{1,0:T(1,128)}', space=vmem, size = 0x12000, scoped, tag = 'internal scratch']
  #allocation2 [shape = 'f32[4,128]{1,0:T(4,128)}', space=vmem, size = 0x800, scoped, tag = 'scratch operand']
  %s0 = inlined_call_operand.hbm [shape: f32[2,4,16], index: 0, kind: input, shape index: {}]
  %s1 = inlined_call_operand.hbm [shape: f32[2,4,16], index: 1, kind: input, shape index: {}]
  %s2 = inlined_call_operand.hbm [shape: f32[2,4,4], index: 2, kind: input, shape index: {}]
  %s3 = inlined_call_operand.hbm [shape: f32[2,4,14], index: 3, kind: output, shape index: {}]
  %s4 = sld [smem:[#allocation0]]
  $region57: #{tpu_custom_call.1} parent=0
    _
  %s6 = ssub.s32 1, %s4
  %s7 = scalar_select 0, %s6, %s4
  $region1: #{tpu_custom_call.1} parent=0
    #allocation3 [shape = 'u8[4096]{0}', space=vmem, size = 0x1000, scoped, tag = 'input window, operand 0']
    #allocation4 [shape = 's32[2]{0}', space=sflag, size = 0x8, scoped, tag = 'scoped memory for tpu_custom_call.1']
    #allocation5 [shape = 's32[2]{0}', space=sflag, size = 0x8, scoped, tag = 'scoped memory for tpu_custom_call.1']
    #allocation6 [shape = 'u8[4096]{0}', space=vmem, size = 0x1000, scoped, tag = 'input window, operand 1']
    #allocation7 [shape = 's32[2]{0}', space=sflag, size = 0x8, scoped, tag = 'scoped memory for tpu_custom_call.1']
    #allocation8 [shape = 'u8[4096]{0}', space=vmem, size = 0x1000, scoped, tag = 'input window, operand 2, single buffered']
    #allocation9 [shape = 'u8[4096]{0}', space=vmem, size = 0x1000, scoped, tag = 'output window, operand 0']
    %8 = vsyncpa [#allocation4], 0
    %s9 = scalar_lea.sflag [#allocation4], 1
    %10 = vsyncpa %s9, 0
    %11 = vsyncpa [#allocation7], 0
    %s12 = scalar_lea.sflag [#allocation7], 1
    %13 = vsyncpa %s12, 0
    %14 = vsyncpa [#allocation5], 0
    %s15 = scalar_lea.sflag [#allocation5], 1
    %16 = vsyncpa %s15, 0
    loop: start=0, step=1, limit=4
    $region2: #{tpu_custom_call.1} parent=1 // loop_pre_header
      _
    $region3: #{tpu_custom_call.1} parent=1 // loop_header
      %s18 = sphi 0, %s22
      %p19 = scmp.ge.s32.totalorder %s18, 4
      %s25 = sphi 0, %s37
      %s26 = sphi 0, %s33
      %s27 = sphi 0, %s25
      %s28 = sphi 0, %s26
      %s29 = sphi 0, %s27
      %s30 = sphi 0, %s28
      %s42 = sphi 0, %s44
      %s45 = sphi 0, %s42
      %s46 = sphi 0, %s45
      %s62 = sphi 0, %s46
      %s76 = sphi 0, %s78
      %s79 = sphi 0, %s76
      %s80 = sphi 0, %s79
      %s96 = sphi 0, %s80
      %s100 = sphi 0, %s100
      %s102 = sphi 0, %s100
      %s103 = sphi 0, %s102
      %s117 = sphi 0, %s103
      %s125 = sphi 0, %s127
      %s128 = sphi 0, %s125
      %s129 = sphi 0, %s128
      %s145 = sphi 0, %s129
    $region4: #{tpu_custom_call.1} parent=1 // loop_header_branch
      %21 = sbr.rel (%p19) target = $region8
    $region5: #{tpu_custom_call.1} parent=1 // loop_body
      %s23 = ssub.s32 %s18, 1
      %s24 = ssub.s32 %s18, 2
      %s31 = sadd.s32 1, %s26
      %p32 = scmp.ge.s32.totalorder %s31, 1
      %s33 = scalar_select %p32, 0, %s31
      %s34 = sadd.s32 1, %s25
      %s35 = scalar_select %p32, %s34, %s25
      %p36 = scmp.ge.s32.totalorder %s35, 2
      %s37 = scalar_select %p36, 0, %s35
      %s38 = ssub.s32 %s25, %s37
      %s39 = ssub.s32 %s26, %s33
      %s40 = sor.u32 %s38, %s39
      %p41 = scmp.eq.s32.totalorder %s40, 0
      %s43 = sadd.s32 %s42, 1
      %s44 = scalar_select %p41, %s42, %s43
      %p47 = pneg %p41
      %p48 = scmp.eq.s32.totalorder %s18, 1
      %p49 = por %p47, %p48
      %p50 = scmp.ne.s32.totalorder %s42, %s45
      %p51 = scmp.eq.s32.totalorder %s18, 0
      %p52 = por %p50, %p51
      %p53 = scmp.ne.s32.totalorder %s42, %s45
      %p54 = scmp.eq.s32.totalorder %s23, 1
      %p55 = por %p53, %p54
      %p56 = scmp.ne.s32.totalorder %s45, %s46
      %p57 = scmp.eq.s32.totalorder %s23, 0
      %p58 = por %p56, %p57
      %p59 = scmp.ne.s32.totalorder %s45, %s46
      %p60 = scmp.eq.s32.totalorder %s24, 1
      %p61 = por %p59, %p60
      %p63 = scmp.ne.s32.totalorder %s46, %s62
      %p64 = scmp.eq.s32.totalorder %s24, 0
      %p65 = por %p63, %p64
      %s66 = sadd.s32 %s26, 1
      %p67 = scmp.lt.s32.totalorder %s66, 0
      %s68 = scalar_select %p67, %s66, 0
      %s69 = sadd.s32 %s33, 1
      %p70 = scmp.lt.s32.totalorder %s69, 0
      %s71 = scalar_select %p70, %s69, 0
      %s72 = ssub.s32 %s25, %s37
      %s73 = ssub.s32 %s68, %s71
      %s74 = sor.u32 %s72, %s73
      %p75 = scmp.eq.s32.totalorder %s74, 0
      %s77 = sadd.s32 %s76, 1
      %s78 = scalar_select %p75, %s76, %s77
      %p81 = pneg %p75
      %p82 = scmp.eq.s32.totalorder %s18, 1
      %p83 = por %p81, %p82
      %p84 = scmp.ne.s32.totalorder %s76, %s79
      %p85 = scmp.eq.s32.totalorder %s18, 0
      %p86 = por %p84, %p85
      %p87 = scmp.ne.s32.totalorder %s76, %s79
      %p88 = scmp.eq.s32.totalorder %s23, 1
      %p89 = por %p87, %p88
      %p90 = scmp.ne.s32.totalorder %s79, %s80
      %p91 = scmp.eq.s32.totalorder %s23, 0
      %p92 = por %p90, %p91
      %p93 = scmp.ne.s32.totalorder %s79, %s80
      %p94 = scmp.eq.s32.totalorder %s24, 1
      %p95 = por %p93, %p94
      %p97 = scmp.ne.s32.totalorder %s80, %s96
      %p98 = scmp.eq.s32.totalorder %s24, 0
      %p99 = por %p97, %p98
      %s101 = sadd.s32 %s100, 1
      %p104 = scmp.eq.s32.totalorder %s18, 1
      %p105 = scmp.ne.s32.totalorder %s100, %s102
      %p106 = scmp.eq.s32.totalorder %s18, 0
      %p107 = por %p105, %p106
      %p108 = scmp.ne.s32.totalorder %s100, %s102
      %p109 = scmp.eq.s32.totalorder %s23, 1
      %p110 = por %p108, %p109
      %p111 = scmp.ne.s32.totalorder %s102, %s103
      %p112 = scmp.eq.s32.totalorder %s23, 0
      %p113 = por %p111, %p112
      %p114 = scmp.ne.s32.totalorder %s102, %s103
      %p115 = scmp.eq.s32.totalorder %s24, 1
      %p116 = por %p114, %p115
      %p118 = scmp.ne.s32.totalorder %s103, %s117
      %p119 = scmp.eq.s32.totalorder %s24, 0
      %p120 = por %p118, %p119
      %s121 = ssub.s32 %s25, %s37
      %s122 = ssub.s32 %s26, %s33
      %s123 = sor.u32 %s121, %s122
      %p124 = scmp.eq.s32.totalorder %s123, 0
      %s126 = sadd.s32 %s125, 1
      %s127 = scalar_select %p124, %s125, %s126
      %p130 = pneg %p124
      %p131 = scmp.eq.s32.totalorder %s18, 1
      %p132 = por %p130, %p131
      %p133 = scmp.ne.s32.totalorder %s125, %s128
      %p134 = scmp.eq.s32.totalorder %s18, 0
      %p135 = por %p133, %p134
      %p136 = scmp.ne.s32.totalorder %s125, %s128
      %p137 = scmp.eq.s32.totalorder %s23, 1
      %p138 = por %p136, %p137
      %p139 = scmp.ne.s32.totalorder %s128, %s129
      %p140 = scmp.eq.s32.totalorder %s23, 0
      %p141 = por %p139, %p140
      %p142 = scmp.ne.s32.totalorder %s128, %s129
      %p143 = scmp.eq.s32.totalorder %s24, 1
      %p144 = por %p142, %p143
      %p146 = scmp.ne.s32.totalorder %s129, %s145
      %p147 = scmp.eq.s32.totalorder %s24, 0
      %p148 = por %p146, %p147
      %p149 = scmp.le.s32.totalorder 1, %s18
      %p150 = scmp.lt.s32.totalorder %s18, 3
      %p151 = pnand %p149, %p150
      %p152 = pneg %p151
      // Predicated region
      $region9: #{tpu_custom_call.1} parent=5 // pred_check
        _
      $region10: #{tpu_custom_call.1} parent=5 // pred_check_branch
        %154 = sbr.rel (%p151) target = $region12
      $region11: #{tpu_custom_call.1} parent=5 // pred_region
        %s155 = ssub.s32 %s18, 1
        // Predicated region
        $region13: #{tpu_custom_call.1} parent=11 // pred_check
          %p156 = pneg %p113
        $region14: #{tpu_custom_call.1} parent=11 // pred_check_branch
          %158 = sbr.rel (%p156) target = $region16
        $region15: #{tpu_custom_call.1} parent=11 // pred_region
          %s160 = ssub.s32 128, 128
          %161 = vsyncadd [#allocation7], %s160
          %s162 = sshll.u32 [#allocation8], 4
          %s163 = int_to_ptr.vmem [resolvable:$true] %s162
          %168 = dma.hbm_to_vmem [thread:$0]  %s2, 128, %s163, [#allocation7], 64, 64, 4
        $region16: #{tpu_custom_call.1} parent=11 // pred_fallthru
          _
      $region12: #{tpu_custom_call.1} parent=5 // pred_fallthru
        _
      %p169 = scmp.lt.s32.totalorder %s18, 2
      // Predicated region
      $region17: #{tpu_custom_call.1} parent=5 // pred_check
        %p170 = pneg %p169
      $region18: #{tpu_custom_call.1} parent=5 // pred_check_branch
        %172 = sbr.rel (%p170) target = $region20
      $region19: #{tpu_custom_call.1} parent=5 // pred_region
        // Predicated region
        $region21: #{tpu_custom_call.1} parent=19 // pred_check
          %p173 = pneg %p52
        $region22: #{tpu_custom_call.1} parent=19 // pred_check_branch
          %175 = sbr.rel (%p173) target = $region24
        $region23: #{tpu_custom_call.1} parent=19 // pred_region
          %s176 = sand.u32 %s42, 1
          %s177 = scalar_lea.sflag [#allocation4], %s176
          %s178 = sand.u32 %s42, 1
          %s179 = smul.addr %s178, 4
          %s180 = scalar_lea.vmem [#allocation3], %s179
          %s182 = ssub.s32 64, 64
          %183 = vsyncadd %s177, %s182
          %s184 = sadd.s32 %s26, %s25
          %s185 = smul.addr %s184, 64
          %s186 = scalar_lea.hbm %s0, %s185
          %s188 = sshll.u32 %s180, 4
          %s189 = int_to_ptr.vmem [resolvable:$true] %s188
          %191 = dma.hbm_to_vmem [thread:$0]  %s186, 64, %s189, %s177
        $region24: #{tpu_custom_call.1} parent=19 // pred_fallthru
          _
        // Predicated region
        $region25: #{tpu_custom_call.1} parent=19 // pred_check
          %p192 = pneg %p86
        $region26: #{tpu_custom_call.1} parent=19 // pred_check_branch
          %194 = sbr.rel (%p192) target = $region28
        $region27: #{tpu_custom_call.1} parent=19 // pred_region
          %s195 = sand.u32 %s18, 1
          %s196 = scalar_lea.sflag [#allocation7], %s195
          %s197 = sand.u32 %s76, 1
          %s198 = smul.addr %s197, 4
          %s199 = scalar_lea.vmem [#allocation6], %s198
          %s200 = sadd.s32 %s26, 1
          %p201 = scmp.lt.s32.totalorder %s200, 0
          %s202 = scalar_select %p201, %s200, 0
          %s204 = ssub.s32 64, 64
          %205 = vsyncadd %s196, %s204
          %s206 = sadd.s32 %s202, %s25
          %s207 = smul.addr %s206, 64
          %s208 = scalar_lea.hbm %s1, %s207
          %s210 = sshll.u32 %s199, 4
          %s211 = int_to_ptr.vmem [resolvable:$true] %s210
          %213 = dma.hbm_to_vmem [thread:$0]  %s208, 64, %s211, %s196
        $region28: #{tpu_custom_call.1} parent=19 // pred_fallthru
          _
      $region20: #{tpu_custom_call.1} parent=5 // pred_fallthru
        _
      %p214 = scmp.le.s32.totalorder 1, %s18
      %p215 = scmp.lt.s32.totalorder %s18, 3
      %p216 = pnand %p214, %p215
      %p217 = pneg %p216
      // Predicated region
      $region29: #{tpu_custom_call.1} parent=5 // pred_check
        _
      $region30: #{tpu_custom_call.1} parent=5 // pred_check_branch
        %219 = sbr.rel (%p216) target = $region32
      $region31: #{tpu_custom_call.1} parent=5 // pred_region
        %s220 = ssub.s32 %s18, 1
        %s221 = sand.u32 %s45, 1
        %s222 = scalar_lea.sflag [#allocation4], %s221
        %s223 = sand.u32 %s45, 1
        %s224 = smul.addr %s223, 4
        %s225 = scalar_lea.vmem [#allocation3], %s224
        // Predicated region
        $region33: #{tpu_custom_call.1} parent=31 // pred_check
          %p226 = pneg %p58
        $region34: #{tpu_custom_call.1} parent=31 // pred_check_branch
          %228 = sbr.rel (%p226) target = $region36
        $region35: #{tpu_custom_call.1} parent=31 // pred_region
          %229 = dma.done %s222, 64
        $region36: #{tpu_custom_call.1} parent=31 // pred_fallthru
          _
        %s230 = sand.u32 %s23, 1
        %s231 = scalar_lea.sflag [#allocation7], %s230
        %s232 = sand.u32 %s79, 1
        %s233 = smul.addr %s232, 4
        %s234 = scalar_lea.vmem [#allocation6], %s233
        // Predicated region
        $region37: #{tpu_custom_call.1} parent=31 // pred_check
          %p235 = pneg %p92
        $region38: #{tpu_custom_call.1} parent=31 // pred_check_branch
          %237 = sbr.rel (%p235) target = $region40
        $region39: #{tpu_custom_call.1} parent=31 // pred_region
          %238 = dma.done %s231, 64
        $region40: #{tpu_custom_call.1} parent=31 // pred_fallthru
          _
        // Predicated region
        $region41: #{tpu_custom_call.1} parent=31 // pred_check
          %p239 = pneg %p113
        $region42: #{tpu_custom_call.1} parent=31 // pred_check_branch
          %241 = sbr.rel (%p239) target = $region44
        $region43: #{tpu_custom_call.1} parent=31 // pred_region
          %242 = dma.done [#allocation7], 128
        $region44: #{tpu_custom_call.1} parent=31 // pred_fallthru
          _
        %s243 = sand.u32 %s45, 1
        %s244 = scalar_lea.sflag [#allocation4], %s243
        %s245 = sand.u32 %s45, 1
        %s246 = smul.addr %s245, 4
        %s247 = scalar_lea.vmem [#allocation3], %s246
        %p248 = pneg %p58
        %p249 = pneg %p55
        %s250 = sand.u32 %s23, 1
        %s251 = scalar_lea.sflag [#allocation7], %s250
        %s252 = sand.u32 %s79, 1
        %s253 = smul.addr %s252, 4
        %s254 = scalar_lea.vmem [#allocation6], %s253
        %p255 = pneg %p92
        %p256 = pneg %p89
        %p257 = pneg %p113
        %p258 = pneg %p110
        %p259 = pneg %p141
        %p260 = pneg %p138
        %s261 = sand.u32 %s128, 1
        %s262 = scalar_lea.sflag [#allocation5], %s261
        %s263 = sand.u32 %s128, 1
        %s264 = smul.addr %s263, 4
        %s265 = scalar_lea.vmem [#allocation9], %s264
        %s266 = sadd.s32 %s28, 1
        %p267 = scmp.lt.s32.totalorder %s266, 0
        %s268 = scalar_select %p267, %s266, 0
        %v269 = vld [vmem:[%s225] sm:$0xf]
        %v270 = vld [vmem:[%s234] sm:$0xf]
        %v271 = vld [vmem:[#allocation8] sm:$0xf]
        %s272 = scalar_lea.vmem [#allocation8], 4
        %v273 = vld [vmem:[%s272] sm:$0xf]
        %275 = vrot.lane.b32.xlu0 %v269, 126
        %v276 = vpop.permute.xlu0 %275
        %vm278 = vcmask 1027072
        %279 = vst.msk [vmem:[#allocation2] sm:$0xf] %vm278, %v276
        %281 = vrot.lane.b32.xlu0 %v270, 126
        %v282 = vpop.permute.xlu0 %281
        %vm284 = vcmask 1044464
        %285 = vst.msk [vmem:[#allocation2] sm:$0xf] %vm284, %v282
        %v286 = vld [vmem:[#allocation2] sm:$0xf]
        %vm287 = vcmask 31744
        %v289 = vsel %vm287, %v273, 0
        %vm291 = vcmask 1043456
        %v293 = vsel %vm291, %v286, 0
        %295 = vmatprep.subr.mxu0 0.0
        %v296 = vand.u32 %v293, 4294901760
        %297 = vmatpush1.msra.mxu0 %v296
        %298 = vmatprep.subr.mxu0 0.0
        %299 = vmatpush1.msra.mxu0 0.0
        %300 = vmatprep.subr.mxu0 0.0
        %301 = vmatpush1.msra.mxu0 0.0
        %302 = vmatprep.subr.mxu0 0.0
        %303 = vmatpush1.msra.mxu0 0.0
        %304 = vmatprep.subr.mxu0 0.0
        %305 = vmatpush1.msra.mxu0 0.0
        %306 = vmatprep.subr.mxu0 0.0
        %307 = vmatpush1.msra.mxu0 0.0
        %308 = vmatprep.subr.mxu0 0.0
        %309 = vmatpush1.msra.mxu0 0.0
        %310 = vmatprep.subr.mxu0 0.0
        %311 = vmatpush1.msra.mxu0 0.0
        %312 = vmatprep.subr.mxu0 0.0
        %313 = vmatpush1.msra.mxu0 0.0
        %314 = vmatprep.subr.mxu0 0.0
        %315 = vmatpush1.msra.mxu0 0.0
        %316 = vmatprep.subr.mxu0 0.0
        %317 = vmatpush1.msra.mxu0 0.0
        %318 = vmatprep.subr.mxu0 0.0
        %319 = vmatpush1.msra.mxu0 0.0
        %320 = vmatprep.subr.mxu0 0.0
        %321 = vmatpush1.msra.mxu0 0.0
        %322 = vmatprep.subr.mxu0 0.0
        %323 = vmatpush1.msra.mxu0 0.0
        %324 = vmatprep.subr.mxu0 0.0
        %325 = vmatpush1.msra.mxu0 0.0
        %326 = vmatprep.subr.mxu0 0.0
        %327 = vmatpush1.msra.mxu0 0.0
        %328 = vmatprep.subr.mxu0 0.0
        %329 = vmatpush1.msra.mxu0 0.0
        %330 = vmatprep.subr.mxu0 0.0
        %331 = vmatpush1.msra.mxu0 0.0
        %332 = vmatprep.subr.mxu0 0.0
        %333 = vmatpush1.msra.mxu0 0.0
        %334 = vmatprep.subr.mxu0 0.0
        %335 = vmatpush1.msra.mxu0 0.0
        %336 = vmatprep.subr.mxu0 0.0
        %337 = vmatpush1.msra.mxu0 0.0
        %338 = vmatprep.subr.mxu0 0.0
        %339 = vmatpush1.msra.mxu0 0.0
        %340 = vmatprep.subr.mxu0 0.0
        %341 = vmatpush1.msra.mxu0 0.0
        %342 = vmatprep.subr.mxu0 0.0
        %343 = vmatpush1.msra.mxu0 0.0
        %344 = vmatprep.subr.mxu0 0.0
        %345 = vmatpush1.msra.mxu0 0.0
        %346 = vmatprep.subr.mxu0 0.0
        %347 = vmatpush1.msra.mxu0 0.0
        %348 = vmatprep.subr.mxu0 0.0
        %349 = vmatpush1.msra.mxu0 0.0
        %350 = vmatprep.subr.mxu0 0.0
        %351 = vmatpush1.msra.mxu0 0.0
        %352 = vmatprep.subr.mxu0 0.0
        %353 = vmatpush1.msra.mxu0 0.0
        %354 = vmatprep.subr.mxu0 0.0
        %355 = vmatpush1.msra.mxu0 0.0
        %356 = vmatprep.subr.mxu0 0.0
        %357 = vmatpush1.msra.mxu0 0.0
        %358 = vmatprep.subr.mxu0 0.0
        %359 = vmatpush1.msra.mxu0 0.0
        %360 = vmatprep.mubr.f32.mxu0 0.0
        %v361 = vand.u32 %v289, 4294901760
        %v362 = vsub.f32 %v289, %v361
        %v363 = vand.u32 %v362, 4294901760
        %v364 = vsub.f32 %v362, %v363
        %v365 = vand.u32 %v364, 4294901760
        %366 = vmatmul.mubr.f32.gmra.mrb[0].mxu0 %v365
        %v367 = vpop.f32.mrb[0].mxu0
        %v368 = vadd.f32 0.0, %v367
        %v369 = vpop.f32.mrb[0].mxu0
        %370 = vdwg.mxu0
        %371 = vmatprep.subr.mxu0 0.0
        %v372 = vand.u32 %v293, 4294901760
        %v373 = vsub.f32 %v293, %v372
        %v374 = vand.u32 %v373, 4294901760
        %v375 = vsub.f32 %v373, %v374
        %v376 = vand.u32 %v375, 4294901760
        %377 = vmatpush1.msra.mxu0 %v376
        %378 = vmatprep.subr.mxu0 0.0
        %379 = vmatpush1.msra.mxu0 0.0
        %380 = vmatprep.subr.mxu0 0.0
        %381 = vmatpush1.msra.mxu0 0.0
        %382 = vmatprep.subr.mxu0 0.0
        %383 = vmatpush1.msra.mxu0 0.0
        %384 = vmatprep.subr.mxu0 0.0
        %385 = vmatpush1.msra.mxu0 0.0
        %386 = vmatprep.subr.mxu0 0.0
        %387 = vmatpush1.msra.mxu0 0.0
        %388 = vmatprep.subr.mxu0 0.0
        %389 = vmatpush1.msra.mxu0 0.0
        %390 = vmatprep.subr.mxu0 0.0
        %391 = vmatpush1.msra.mxu0 0.0
        %392 = vmatprep.subr.mxu0 0.0
        %393 = vmatpush1.msra.mxu0 0.0
        %394 = vmatprep.subr.mxu0 0.0
        %395 = vmatpush1.msra.mxu0 0.0
        %396 = vmatprep.subr.mxu0 0.0
        %397 = vmatpush1.msra.mxu0 0.0
        %398 = vmatprep.subr.mxu0 0.0
        %399 = vmatpush1.msra.mxu0 0.0
        %400 = vmatprep.subr.mxu0 0.0
        %401 = vmatpush1.msra.mxu0 0.0
        %402 = vmatprep.subr.mxu0 0.0
        %403 = vmatpush1.msra.mxu0 0.0
        %404 = vmatprep.subr.mxu0 0.0
        %405 = vmatpush1.msra.mxu0 0.0
        %406 = vmatprep.subr.mxu0 0.0
        %407 = vmatpush1.msra.mxu0 0.0
        %408 = vmatprep.subr.mxu0 0.0
        %409 = vmatpush1.msra.mxu0 0.0
        %410 = vmatprep.subr.mxu0 0.0
        %411 = vmatpush1.msra.mxu0 0.0
        %412 = vmatprep.subr.mxu0 0.0
        %413 = vmatpush1.msra.mxu0 0.0
        %414 = vmatprep.subr.mxu0 0.0
        %415 = vmatpush1.msra.mxu0 0.0
        %416 = vmatprep.subr.mxu0 0.0
        %417 = vmatpush1.msra.mxu0 0.0
        %418 = vmatprep.subr.mxu0 0.0
        %419 = vmatpush1.msra.mxu0 0.0
        %420 = vmatprep.subr.mxu0 0.0
        %421 = vmatpush1.msra.mxu0 0.0
        %422 = vmatprep.subr.mxu0 0.0
        %423 = vmatpush1.msra.mxu0 0.0
        %424 = vmatprep.subr.mxu0 0.0
        %425 = vmatpush1.msra.mxu0 0.0
        %426 = vmatprep.subr.mxu0 0.0
        %427 = vmatpush1.msra.mxu0 0.0
        %428 = vmatprep.subr.mxu0 0.0
        %429 = vmatpush1.msra.mxu0 0.0
        %430 = vmatprep.subr.mxu0 0.0
        %431 = vmatpush1.msra.mxu0 0.0
        %432 = vmatprep.subr.mxu0 0.0
        %433 = vmatpush1.msra.mxu0 0.0
        %434 = vmatprep.subr.mxu0 0.0
        %435 = vmatpush1.msra.mxu0 0.0
        %436 = vmatprep.subr.mxu0 0.0
        %437 = vmatpush1.msra.mxu0 0.0
        %438 = vmatprep.subr.mxu0 0.0
        %439 = vmatpush1.msra.mxu0 0.0
        %440 = vmatprep.mubr.f32.mxu0 0.0
        %v441 = vand.u32 %v289, 4294901760
        %442 = vmatmul.mubr.f32.gmra.mrb[0].mxu0 %v441
        %v443 = vpop.f32.mrb[0].mxu0
        %v444 = vadd.f32 %v368, %v443
        %v445 = vpop.f32.mrb[0].mxu0
        %446 = vdwg.mxu0
        %447 = vmatprep.subr.mxu0 0.0
        %v448 = vand.u32 %v293, 4294901760
        %v449 = vsub.f32 %v293, %v448
        %450 = vmatpush1.msra.mxu0 %v449
        %451 = vmatprep.subr.mxu0 0.0
        %452 = vmatpush1.msra.mxu0 0.0
        %453 = vmatprep.subr.mxu0 0.0
        %454 = vmatpush1.msra.mxu0 0.0
        %455 = vmatprep.subr.mxu0 0.0
        %456 = vmatpush1.msra.mxu0 0.0
        %457 = vmatprep.subr.mxu0 0.0
        %458 = vmatpush1.msra.mxu0 0.0
        %459 = vmatprep.subr.mxu0 0.0
        %460 = vmatpush1.msra.mxu0 0.0
        %461 = vmatprep.subr.mxu0 0.0
        %462 = vmatpush1.msra.mxu0 0.0
        %463 = vmatprep.subr.mxu0 0.0
        %464 = vmatpush1.msra.mxu0 0.0
        %465 = vmatprep.subr.mxu0 0.0
        %466 = vmatpush1.msra.mxu0 0.0
        %467 = vmatprep.subr.mxu0 0.0
        %468 = vmatpush1.msra.mxu0 0.0
        %469 = vmatprep.subr.mxu0 0.0
        %470 = vmatpush1.msra.mxu0 0.0
        %471 = vmatprep.subr.mxu0 0.0
        %472 = vmatpush1.msra.mxu0 0.0
        %473 = vmatprep.subr.mxu0 0.0
        %474 = vmatpush1.msra.mxu0 0.0
        %475 = vmatprep.subr.mxu0 0.0
        %476 = vmatpush1.msra.mxu0 0.0
        %477 = vmatprep.subr.mxu0 0.0
        %478 = vmatpush1.msra.mxu0 0.0
        %479 = vmatprep.subr.mxu0 0.0
        %480 = vmatpush1.msra.mxu0 0.0
        %481 = vmatprep.subr.mxu0 0.0
        %482 = vmatpush1.msra.mxu0 0.0
        %483 = vmatprep.subr.mxu0 0.0
        %484 = vmatpush1.msra.mxu0 0.0
        %485 = vmatprep.subr.mxu0 0.0
        %486 = vmatpush1.msra.mxu0 0.0
        %487 = vmatprep.subr.mxu0 0.0
        %488 = vmatpush1.msra.mxu0 0.0
        %489 = vmatprep.subr.mxu0 0.0
        %490 = vmatpush1.msra.mxu0 0.0
        %491 = vmatprep.subr.mxu0 0.0
        %492 = vmatpush1.msra.mxu0 0.0
        %493 = vmatprep.subr.mxu0 0.0
        %494 = vmatpush1.msra.mxu0 0.0
        %495 = vmatprep.subr.mxu0 0.0
        %496 = vmatpush1.msra.mxu0 0.0
        %497 = vmatprep.subr.mxu0 0.0
        %498 = vmatpush1.msra.mxu0 0.0
        %499 = vmatprep.subr.mxu0 0.0
        %500 = vmatpush1.msra.mxu0 0.0
        %501 = vmatprep.subr.mxu0 0.0
        %502 = vmatpush1.msra.mxu0 0.0
        %503 = vmatprep.subr.mxu0 0.0
        %504 = vmatpush1.msra.mxu0 0.0
        %505 = vmatprep.subr.mxu0 0.0
        %506 = vmatpush1.msra.mxu0 0.0
        %507 = vmatprep.subr.mxu0 0.0
        %508 = vmatpush1.msra.mxu0 0.0
        %509 = vmatprep.subr.mxu0 0.0
        %510 = vmatpush1.msra.mxu0 0.0
        %511 = vmatprep.subr.mxu0 0.0
        %512 = vmatpush1.msra.mxu0 0.0
        %513 = vmatprep.mubr.f32.mxu0 0.0
        %v514 = vand.u32 %v289, 4294901760
        %v515 = vsub.f32 %v289, %v514
        %516 = vmatmul.mubr.f32.gmra.mrb[0].mxu0 %v515
        %v517 = vpop.f32.mrb[0].mxu0
        %v518 = vadd.f32 %v444, %v517
        %v519 = vpop.f32.mrb[0].mxu0
        %520 = vdwg.mxu0
        %521 = vmatprep.subr.mxu0 0.0
        %v522 = vand.u32 %v293, 4294901760
        %523 = vmatpush1.msra.mxu0 %v522
        %524 = vmatprep.subr.mxu0 0.0
        %525 = vmatpush1.msra.mxu0 0.0
        %526 = vmatprep.subr.mxu0 0.0
        %527 = vmatpush1.msra.mxu0 0.0
        %528 = vmatprep.subr.mxu0 0.0
        %529 = vmatpush1.msra.mxu0 0.0
        %530 = vmatprep.subr.mxu0 0.0
        %531 = vmatpush1.msra.mxu0 0.0
        %532 = vmatprep.subr.mxu0 0.0
        %533 = vmatpush1.msra.mxu0 0.0
        %534 = vmatprep.subr.mxu0 0.0
        %535 = vmatpush1.msra.mxu0 0.0
        %536 = vmatprep.subr.mxu0 0.0
        %537 = vmatpush1.msra.mxu0 0.0
        %538 = vmatprep.subr.mxu0 0.0
        %539 = vmatpush1.msra.mxu0 0.0
        %540 = vmatprep.subr.mxu0 0.0
        %541 = vmatpush1.msra.mxu0 0.0
        %542 = vmatprep.subr.mxu0 0.0
        %543 = vmatpush1.msra.mxu0 0.0
        %544 = vmatprep.subr.mxu0 0.0
        %545 = vmatpush1.msra.mxu0 0.0
        %546 = vmatprep.subr.mxu0 0.0
        %547 = vmatpush1.msra.mxu0 0.0
        %548 = vmatprep.subr.mxu0 0.0
        %549 = vmatpush1.msra.mxu0 0.0
        %550 = vmatprep.subr.mxu0 0.0
        %551 = vmatpush1.msra.mxu0 0.0
        %552 = vmatprep.subr.mxu0 0.0
        %553 = vmatpush1.msra.mxu0 0.0
        %554 = vmatprep.subr.mxu0 0.0
        %555 = vmatpush1.msra.mxu0 0.0
        %556 = vmatprep.subr.mxu0 0.0
        %557 = vmatpush1.msra.mxu0 0.0
        %558 = vmatprep.subr.mxu0 0.0
        %559 = vmatpush1.msra.mxu0 0.0
        %560 = vmatprep.subr.mxu0 0.0
        %561 = vmatpush1.msra.mxu0 0.0
        %562 = vmatprep.subr.mxu0 0.0
        %563 = vmatpush1.msra.mxu0 0.0
        %564 = vmatprep.subr.mxu0 0.0
        %565 = vmatpush1.msra.mxu0 0.0
        %566 = vmatprep.subr.mxu0 0.0
        %567 = vmatpush1.msra.mxu0 0.0
        %568 = vmatprep.subr.mxu0 0.0
        %569 = vmatpush1.msra.mxu0 0.0
        %570 = vmatprep.subr.mxu0 0.0
        %571 = vmatpush1.msra.mxu0 0.0
        %572 = vmatprep.subr.mxu0 0.0
        %573 = vmatpush1.msra.mxu0 0.0
        %574 = vmatprep.subr.mxu0 0.0
        %575 = vmatpush1.msra.mxu0 0.0
        %576 = vmatprep.subr.mxu0 0.0
        %577 = vmatpush1.msra.mxu0 0.0
        %578 = vmatprep.subr.mxu0 0.0
        %579 = vmatpush1.msra.mxu0 0.0
        %580 = vmatprep.subr.mxu0 0.0
        %581 = vmatpush1.msra.mxu0 0.0
        %582 = vmatprep.subr.mxu0 0.0
        %583 = vmatpush1.msra.mxu0 0.0
        %584 = vmatprep.subr.mxu0 0.0
        %585 = vmatpush1.msra.mxu0 0.0
        %586 = vmatprep.mubr.f32.mxu0 0.0
        %v587 = vand.u32 %v289, 4294901760
        %v588 = vsub.f32 %v289, %v587
        %v589 = vand.u32 %v588, 4294901760
        %590 = vmatmul.mubr.f32.gmra.mrb[0].mxu0 %v589
        %v591 = vpop.f32.mrb[0].mxu0
        %v592 = vadd.f32 %v518, %v591
        %v593 = vpop.f32.mrb[0].mxu0
        %594 = vdwg.mxu0
        %595 = vmatprep.subr.mxu0 0.0
        %v596 = vand.u32 %v293, 4294901760
        %v597 = vsub.f32 %v293, %v596
        %v598 = vand.u32 %v597, 4294901760
        %599 = vmatpush1.msra.mxu0 %v598
        %600 = vmatprep.subr.mxu0 0.0
        %601 = vmatpush1.msra.mxu0 0.0
        %602 = vmatprep.subr.mxu0 0.0
        %603 = vmatpush1.msra.mxu0 0.0
        %604 = vmatprep.subr.mxu0 0.0
        %605 = vmatpush1.msra.mxu0 0.0
        %606 = vmatprep.subr.mxu0 0.0
        %607 = vmatpush1.msra.mxu0 0.0
        %608 = vmatprep.subr.mxu0 0.0
        %609 = vmatpush1.msra.mxu0 0.0
        %610 = vmatprep.subr.mxu0 0.0
        %611 = vmatpush1.msra.mxu0 0.0
        %612 = vmatprep.subr.mxu0 0.0
        %613 = vmatpush1.msra.mxu0 0.0
        %614 = vmatprep.subr.mxu0 0.0
        %615 = vmatpush1.msra.mxu0 0.0
        %616 = vmatprep.subr.mxu0 0.0
        %617 = vmatpush1.msra.mxu0 0.0
        %618 = vmatprep.subr.mxu0 0.0
        %619 = vmatpush1.msra.mxu0 0.0
        %620 = vmatprep.subr.mxu0 0.0
        %621 = vmatpush1.msra.mxu0 0.0
        %622 = vmatprep.subr.mxu0 0.0
        %623 = vmatpush1.msra.mxu0 0.0
        %624 = vmatprep.subr.mxu0 0.0
        %625 = vmatpush1.msra.mxu0 0.0
        %626 = vmatprep.subr.mxu0 0.0
        %627 = vmatpush1.msra.mxu0 0.0
        %628 = vmatprep.subr.mxu0 0.0
        %629 = vmatpush1.msra.mxu0 0.0
        %630 = vmatprep.subr.mxu0 0.0
        %631 = vmatpush1.msra.mxu0 0.0
        %632 = vmatprep.subr.mxu0 0.0
        %633 = vmatpush1.msra.mxu0 0.0
        %634 = vmatprep.subr.mxu0 0.0
        %635 = vmatpush1.msra.mxu0 0.0
        %636 = vmatprep.subr.mxu0 0.0
        %637 = vmatpush1.msra.mxu0 0.0
        %638 = vmatprep.subr.mxu0 0.0
        %639 = vmatpush1.msra.mxu0 0.0
        %640 = vmatprep.subr.mxu0 0.0
        %641 = vmatpush1.msra.mxu0 0.0
        %642 = vmatprep.subr.mxu0 0.0
        %643 = vmatpush1.msra.mxu0 0.0
        %644 = vmatprep.subr.mxu0 0.0
        %645 = vmatpush1.msra.mxu0 0.0
        %646 = vmatprep.subr.mxu0 0.0
        %647 = vmatpush1.msra.mxu0 0.0
        %648 = vmatprep.subr.mxu0 0.0
        %649 = vmatpush1.msra.mxu0 0.0
        %650 = vmatprep.subr.mxu0 0.0
        %651 = vmatpush1.msra.mxu0 0.0
        %652 = vmatprep.subr.mxu0 0.0
        %653 = vmatpush1.msra.mxu0 0.0
        %654 = vmatprep.subr.mxu0 0.0
        %655 = vmatpush1.msra.mxu0 0.0
        %656 = vmatprep.subr.mxu0 0.0
        %657 = vmatpush1.msra.mxu0 0.0
        %658 = vmatprep.subr.mxu0 0.0
        %659 = vmatpush1.msra.mxu0 0.0
        %660 = vmatprep.subr.mxu0 0.0
        %661 = vmatpush1.msra.mxu0 0.0
        %662 = vmatprep.mubr.f32.mxu0 0.0
        %v663 = vand.u32 %v289, 4294901760
        %664 = vmatmul.mubr.f32.gmra.mrb[0].mxu0 %v663
        %v665 = vpop.f32.mrb[0].mxu0
        %v666 = vadd.f32 %v592, %v665
        %v667 = vpop.f32.mrb[0].mxu0
        %668 = vdwg.mxu0
        %669 = vmatprep.subr.mxu0 0.0
        %v670 = vand.u32 %v293, 4294901760
        %671 = vmatpush1.msra.mxu0 %v670
        %672 = vmatprep.subr.mxu0 0.0
        %673 = vmatpush1.msra.mxu0 0.0
        %674 = vmatprep.subr.mxu0 0.0
        %675 = vmatpush1.msra.mxu0 0.0
        %676 = vmatprep.subr.mxu0 0.0
        %677 = vmatpush1.msra.mxu0 0.0
        %678 = vmatprep.subr.mxu0 0.0
        %679 = vmatpush1.msra.mxu0 0.0
        %680 = vmatprep.subr.mxu0 0.0
        %681 = vmatpush1.msra.mxu0 0.0
        %682 = vmatprep.subr.mxu0 0.0
        %683 = vmatpush1.msra.mxu0 0.0
        %684 = vmatprep.subr.mxu0 0.0
        %685 = vmatpush1.msra.mxu0 0.0
        %686 = vmatprep.subr.mxu0 0.0
        %687 = vmatpush1.msra.mxu0 0.0
        %688 = vmatprep.subr.mxu0 0.0
        %689 = vmatpush1.msra.mxu0 0.0
        %690 = vmatprep.subr.mxu0 0.0
        %691 = vmatpush1.msra.mxu0 0.0
        %692 = vmatprep.subr.mxu0 0.0
        %693 = vmatpush1.msra.mxu0 0.0
        %694 = vmatprep.subr.mxu0 0.0
        %695 = vmatpush1.msra.mxu0 0.0
        %696 = vmatprep.subr.mxu0 0.0
        %697 = vmatpush1.msra.mxu0 0.0
        %698 = vmatprep.subr.mxu0 0.0
        %699 = vmatpush1.msra.mxu0 0.0
        %700 = vmatprep.subr.mxu0 0.0
        %701 = vmatpush1.msra.mxu0 0.0
        %702 = vmatprep.subr.mxu0 0.0
        %703 = vmatpush1.msra.mxu0 0.0
        %704 = vmatprep.subr.mxu0 0.0
        %705 = vmatpush1.msra.mxu0 0.0
        %706 = vmatprep.subr.mxu0 0.0
        %707 = vmatpush1.msra.mxu0 0.0
        %708 = vmatprep.subr.mxu0 0.0
        %709 = vmatpush1.msra.mxu0 0.0
        %710 = vmatprep.subr.mxu0 0.0
        %711 = vmatpush1.msra.mxu0 0.0
        %712 = vmatprep.subr.mxu0 0.0
        %713 = vmatpush1.msra.mxu0 0.0
        %714 = vmatprep.subr.mxu0 0.0
        %715 = vmatpush1.msra.mxu0 0.0
        %716 = vmatprep.subr.mxu0 0.0
        %717 = vmatpush1.msra.mxu0 0.0
        %718 = vmatprep.subr.mxu0 0.0
        %719 = vmatpush1.msra.mxu0 0.0
        %720 = vmatprep.subr.mxu0 0.0
        %721 = vmatpush1.msra.mxu0 0.0
        %722 = vmatprep.subr.mxu0 0.0
        %723 = vmatpush1.msra.mxu0 0.0
        %724 = vmatprep.subr.mxu0 0.0
        %725 = vmatpush1.msra.mxu0 0.0
        %726 = vmatprep.subr.mxu0 0.0
        %727 = vmatpush1.msra.mxu0 0.0
        %728 = vmatprep.subr.mxu0 0.0
        %729 = vmatpush1.msra.mxu0 0.0
        %730 = vmatprep.subr.mxu0 0.0
        %731 = vmatpush1.msra.mxu0 0.0
        %732 = vmatprep.subr.mxu0 0.0
        %733 = vmatpush1.msra.mxu0 0.0
        %734 = vmatprep.mubr.f32.mxu0 0.0
        %v735 = vand.u32 %v289, 4294901760
        %736 = vmatmul.mubr.f32.gmra.mrb[0].mxu0 %v735
        %v737 = vpop.f32.mrb[0].mxu0
        %v738 = vadd.f32 %v666, %v737
        %v739 = vpop.f32.mrb[0].mxu0
        %740 = vdwg.mxu0
        %v742 = vsel %vm287, %v271, 0
        %v744 = vsel %vm291, %v269, 0
        %746 = vmatprep.subr.mxu0 0.0
        %v747 = vand.u32 %v744, 4294901760
        %748 = vmatpush1.msra.mxu0 %v747
        %749 = vmatprep.subr.mxu0 0.0
        %750 = vmatpush1.msra.mxu0 0.0
        %751 = vmatprep.subr.mxu0 0.0
        %752 = vmatpush1.msra.mxu0 0.0
        %753 = vmatprep.subr.mxu0 0.0
        %754 = vmatpush1.msra.mxu0 0.0
        %755 = vmatprep.subr.mxu0 0.0
        %756 = vmatpush1.msra.mxu0 0.0
        %757 = vmatprep.subr.mxu0 0.0
        %758 = vmatpush1.msra.mxu0 0.0
        %759 = vmatprep.subr.mxu0 0.0
        %760 = vmatpush1.msra.mxu0 0.0
        %761 = vmatprep.subr.mxu0 0.0
        %762 = vmatpush1.msra.mxu0 0.0
        %763 = vmatprep.subr.mxu0 0.0
        %764 = vmatpush1.msra.mxu0 0.0
        %765 = vmatprep.subr.mxu0 0.0
        %766 = vmatpush1.msra.mxu0 0.0
        %767 = vmatprep.subr.mxu0 0.0
        %768 = vmatpush1.msra.mxu0 0.0
        %769 = vmatprep.subr.mxu0 0.0
        %770 = vmatpush1.msra.mxu0 0.0
        %771 = vmatprep.subr.mxu0 0.0
        %772 = vmatpush1.msra.mxu0 0.0
        %773 = vmatprep.subr.mxu0 0.0
        %774 = vmatpush1.msra.mxu0 0.0
        %775 = vmatprep.subr.mxu0 0.0
        %776 = vmatpush1.msra.mxu0 0.0
        %777 = vmatprep.subr.mxu0 0.0
        %778 = vmatpush1.msra.mxu0 0.0
        %779 = vmatprep.subr.mxu0 0.0
        %780 = vmatpush1.msra.mxu0 0.0
        %781 = vmatprep.subr.mxu0 0.0
        %782 = vmatpush1.msra.mxu0 0.0
        %783 = vmatprep.subr.mxu0 0.0
        %784 = vmatpush1.msra.mxu0 0.0
        %785 = vmatprep.subr.mxu0 0.0
        %786 = vmatpush1.msra.mxu0 0.0
        %787 = vmatprep.subr.mxu0 0.0
        %788 = vmatpush1.msra.mxu0 0.0
        %789 = vmatprep.subr.mxu0 0.0
        %790 = vmatpush1.msra.mxu0 0.0
        %791 = vmatprep.subr.mxu0 0.0
        %792 = vmatpush1.msra.mxu0 0.0
        %793 = vmatprep.subr.mxu0 0.0
        %794 = vmatpush1.msra.mxu0 0.0
        %795 = vmatprep.subr.mxu0 0.0
        %796 = vmatpush1.msra.mxu0 0.0
        %797 = vmatprep.subr.mxu0 0.0
        %798 = vmatpush1.msra.mxu0 0.0
        %799 = vmatprep.subr.mxu0 0.0
        %800 = vmatpush1.msra.mxu0 0.0
        %801 = vmatprep.subr.mxu0 0.0
        %802 = vmatpush1.msra.mxu0 0.0
        %803 = vmatprep.subr.mxu0 0.0
        %804 = vmatpush1.msra.mxu0 0.0
        %805 = vmatprep.subr.mxu0 0.0
        %806 = vmatpush1.msra.mxu0 0.0
        %807 = vmatprep.subr.mxu0 0.0
        %808 = vmatpush1.msra.mxu0 0.0
        %809 = vmatprep.subr.mxu0 0.0
        %810 = vmatpush1.msra.mxu0 0.0
        %811 = vmatprep.mubr.f32.mxu0 0.0
        %v812 = vand.u32 %v742, 4294901760
        %v813 = vsub.f32 %v742, %v812
        %v814 = vand.u32 %v813, 4294901760
        %v815 = vsub.f32 %v813, %v814
        %v816 = vand.u32 %v815, 4294901760
        %817 = vmatmul.mubr.f32.gmra.mrb[0].mxu0 %v816
        %v818 = vpop.f32.mrb[0].mxu0
        %v819 = vadd.f32 %v738, %v818
        %v820 = vpop.f32.mrb[0].mxu0
        %821 = vdwg.mxu0
        %822 = vmatprep.subr.mxu0 0.0
        %v823 = vand.u32 %v744, 4294901760
        %v824 = vsub.f32 %v744, %v823
        %v825 = vand.u32 %v824, 4294901760
        %v826 = vsub.f32 %v824, %v825
        %v827 = vand.u32 %v826, 4294901760
        %828 = vmatpush1.msra.mxu0 %v827
        %829 = vmatprep.subr.mxu0 0.0
        %830 = vmatpush1.msra.mxu0 0.0
        %831 = vmatprep.subr.mxu0 0.0
        %832 = vmatpush1.msra.mxu0 0.0
        %833 = vmatprep.subr.mxu0 0.0
        %834 = vmatpush1.msra.mxu0 0.0
        %835 = vmatprep.subr.mxu0 0.0
        %836 = vmatpush1.msra.mxu0 0.0
        %837 = vmatprep.subr.mxu0 0.0
        %838 = vmatpush1.msra.mxu0 0.0
        %839 = vmatprep.subr.mxu0 0.0
        %840 = vmatpush1.msra.mxu0 0.0
        %841 = vmatprep.subr.mxu0 0.0
        %842 = vmatpush1.msra.mxu0 0.0
        %843 = vmatprep.subr.mxu0 0.0
        %844 = vmatpush1.msra.mxu0 0.0
        %845 = vmatprep.subr.mxu0 0.0
        %846 = vmatpush1.msra.mxu0 0.0
        %847 = vmatprep.subr.mxu0 0.0
        %848 = vmatpush1.msra.mxu0 0.0
        %849 = vmatprep.subr.mxu0 0.0
        %850 = vmatpush1.msra.mxu0 0.0
        %851 = vmatprep.subr.mxu0 0.0
        %852 = vmatpush1.msra.mxu0 0.0
        %853 = vmatprep.subr.mxu0 0.0
        %854 = vmatpush1.msra.mxu0 0.0
        %855 = vmatprep.subr.mxu0 0.0
        %856 = vmatpush1.msra.mxu0 0.0
        %857 = vmatprep.subr.mxu0 0.0
        %858 = vmatpush1.msra.mxu0 0.0
        %859 = vmatprep.subr.mxu0 0.0
        %860 = vmatpush1.msra.mxu0 0.0
        %861 = vmatprep.subr.mxu0 0.0
        %862 = vmatpush1.msra.mxu0 0.0
        %863 = vmatprep.subr.mxu0 0.0
        %864 = vmatpush1.msra.mxu0 0.0
        %865 = vmatprep.subr.mxu0 0.0
        %866 = vmatpush1.msra.mxu0 0.0
        %867 = vmatprep.subr.mxu0 0.0
        %868 = vmatpush1.msra.mxu0 0.0
        %869 = vmatprep.subr.mxu0 0.0
        %870 = vmatpush1.msra.mxu0 0.0
        %871 = vmatprep.subr.mxu0 0.0
        %872 = vmatpush1.msra.mxu0 0.0
        %873 = vmatprep.subr.mxu0 0.0
        %874 = vmatpush1.msra.mxu0 0.0
        %875 = vmatprep.subr.mxu0 0.0
        %876 = vmatpush1.msra.mxu0 0.0
        %877 = vmatprep.subr.mxu0 0.0
        %878 = vmatpush1.msra.mxu0 0.0
        %879 = vmatprep.subr.mxu0 0.0
        %880 = vmatpush1.msra.mxu0 0.0
        %881 = vmatprep.subr.mxu0 0.0
        %882 = vmatpush1.msra.mxu0 0.0
        %883 = vmatprep.subr.mxu0 0.0
        %884 = vmatpush1.msra.mxu0 0.0
        %885 = vmatprep.subr.mxu0 0.0
        %886 = vmatpush1.msra.mxu0 0.0
        %887 = vmatprep.subr.mxu0 0.0
        %888 = vmatpush1.msra.mxu0 0.0
        %889 = vmatprep.subr.mxu0 0.0
        %890 = vmatpush1.msra.mxu0 0.0
        %891 = vmatprep.mubr.f32.mxu0 0.0
        %v892 = vand.u32 %v742, 4294901760
        %893 = vmatmul.mubr.f32.gmra.mrb[0].mxu0 %v892
        %v894 = vpop.f32.mrb[0].mxu0
        %v895 = vadd.f32 %v819, %v894
        %v896 = vpop.f32.mrb[0].mxu0
        %897 = vdwg.mxu0
        %898 = vmatprep.subr.mxu0 0.0
        %v899 = vand.u32 %v744, 4294901760
        %v900 = vsub.f32 %v744, %v899
        %901 = vmatpush1.msra.mxu0 %v900
        %902 = vmatprep.subr.mxu0 0.0
        %903 = vmatpush1.msra.mxu0 0.0
        %904 = vmatprep.subr.mxu0 0.0
        %905 = vmatpush1.msra.mxu0 0.0
        %906 = vmatprep.subr.mxu0 0.0
        %907 = vmatpush1.msra.mxu0 0.0
        %908 = vmatprep.subr.mxu0 0.0
        %909 = vmatpush1.msra.mxu0 0.0
        %910 = vmatprep.subr.mxu0 0.0
        %911 = vmatpush1.msra.mxu0 0.0
        %912 = vmatprep.subr.mxu0 0.0
        %913 = vmatpush1.msra.mxu0 0.0
        %914 = vmatprep.subr.mxu0 0.0
        %915 = vmatpush1.msra.mxu0 0.0
        %916 = vmatprep.subr.mxu0 0.0
        %917 = vmatpush1.msra.mxu0 0.0
        %918 = vmatprep.subr.mxu0 0.0
        %919 = vmatpush1.msra.mxu0 0.0
        %920 = vmatprep.subr.mxu0 0.0
        %921 = vmatpush1.msra.mxu0 0.0
        %922 = vmatprep.subr.mxu0 0.0
        %923 = vmatpush1.msra.mxu0 0.0
        %924 = vmatprep.subr.mxu0 0.0
        %925 = vmatpush1.msra.mxu0 0.0
        %926 = vmatprep.subr.mxu0 0.0
        %927 = vmatpush1.msra.mxu0 0.0
        %928 = vmatprep.subr.mxu0 0.0
        %929 = vmatpush1.msra.mxu0 0.0
        %930 = vmatprep.subr.mxu0 0.0
        %931 = vmatpush1.msra.mxu0 0.0
        %932 = vmatprep.subr.mxu0 0.0
        %933 = vmatpush1.msra.mxu0 0.0
        %934 = vmatprep.subr.mxu0 0.0
        %935 = vmatpush1.msra.mxu0 0.0
        %936 = vmatprep.subr.mxu0 0.0
        %937 = vmatpush1.msra.mxu0 0.0
        %938 = vmatprep.subr.mxu0 0.0
        %939 = vmatpush1.msra.mxu0 0.0
        %940 = vmatprep.subr.mxu0 0.0
        %941 = vmatpush1.msra.mxu0 0.0
        %942 = vmatprep.subr.mxu0 0.0
        %943 = vmatpush1.msra.mxu0 0.0
        %944 = vmatprep.subr.mxu0 0.0
        %945 = vmatpush1.msra.mxu0 0.0
        %946 = vmatprep.subr.mxu0 0.0
        %947 = vmatpush1.msra.mxu0 0.0
        %948 = vmatprep.subr.mxu0 0.0
        %949 = vmatpush1.msra.mxu0 0.0
        %950 = vmatprep.subr.mxu0 0.0
        %951 = vmatpush1.msra.mxu0 0.0
        %952 = vmatprep.subr.mxu0 0.0
        %953 = vmatpush1.msra.mxu0 0.0
        %954 = vmatprep.subr.mxu0 0.0
        %955 = vmatpush1.msra.mxu0 0.0
        %956 = vmatprep.subr.mxu0 0.0
        %957 = vmatpush1.msra.mxu0 0.0
        %958 = vmatprep.subr.mxu0 0.0
        %959 = vmatpush1.msra.mxu0 0.0
        %960 = vmatprep.subr.mxu0 0.0
        %961 = vmatpush1.msra.mxu0 0.0
        %962 = vmatprep.subr.mxu0 0.0
        %963 = vmatpush1.msra.mxu0 0.0
        %964 = vmatprep.mubr.f32.mxu0 0.0
        %v965 = vand.u32 %v742, 4294901760
        %v966 = vsub.f32 %v742, %v965
        %967 = vmatmul.mubr.f32.gmra.mrb[0].mxu0 %v966
        %v968 = vpop.f32.mrb[0].mxu0
        %v969 = vadd.f32 %v895, %v968
        %v970 = vpop.f32.mrb[0].mxu0
        %971 = vdwg.mxu0
        %972 = vmatprep.subr.mxu0 0.0
        %v973 = vand.u32 %v744, 4294901760
        %974 = vmatpush1.msra.mxu0 %v973
        %975 = vmatprep.subr.mxu0 0.0
        %976 = vmatpush1.msra.mxu0 0.0
        %977 = vmatprep.subr.mxu0 0.0
        %978 = vmatpush1.msra.mxu0 0.0
        %979 = vmatprep.subr.mxu0 0.0
        %980 = vmatpush1.msra.mxu0 0.0
        %981 = vmatprep.subr.mxu0 0.0
        %982 = vmatpush1.msra.mxu0 0.0
        %983 = vmatprep.subr.mxu0 0.0
        %984 = vmatpush1.msra.mxu0 0.0
        %985 = vmatprep.subr.mxu0 0.0
        %986 = vmatpush1.msra.mxu0 0.0
        %987 = vmatprep.subr.mxu0 0.0
        %988 = vmatpush1.msra.mxu0 0.0
        %989 = vmatprep.subr.mxu0 0.0
        %990 = vmatpush1.msra.mxu0 0.0
        %991 = vmatprep.subr.mxu0 0.0
        %992 = vmatpush1.msra.mxu0 0.0
        %993 = vmatprep.subr.mxu0 0.0
        %994 = vmatpush1.msra.mxu0 0.0
        %995 = vmatprep.subr.mxu0 0.0
        %996 = vmatpush1.msra.mxu0 0.0
        %997 = vmatprep.subr.mxu0 0.0
        %998 = vmatpush1.msra.mxu0 0.0
        %999 = vmatprep.subr.mxu0 0.0
        %1000 = vmatpush1.msra.mxu0 0.0
        %1001 = vmatprep.subr.mxu0 0.0
        %1002 = vmatpush1.msra.mxu0 0.0
        %1003 = vmatprep.subr.mxu0 0.0
        %1004 = vmatpush1.msra.mxu0 0.0
        %1005 = vmatprep.subr.mxu0 0.0
        %1006 = vmatpush1.msra.mxu0 0.0
        %1007 = vmatprep.subr.mxu0 0.0
        %1008 = vmatpush1.msra.mxu0 0.0
        %1009 = vmatprep.subr.mxu0 0.0
        %1010 = vmatpush1.msra.mxu0 0.0
        %1011 = vmatprep.subr.mxu0 0.0
        %1012 = vmatpush1.msra.mxu0 0.0
        %1013 = vmatprep.subr.mxu0 0.0
        %1014 = vmatpush1.msra.mxu0 0.0
        %1015 = vmatprep.subr.mxu0 0.0
        %1016 = vmatpush1.msra.mxu0 0.0
        %1017 = vmatprep.subr.mxu0 0.0
        %1018 = vmatpush1.msra.mxu0 0.0
        %1019 = vmatprep.subr.mxu0 0.0
        %1020 = vmatpush1.msra.mxu0 0.0
        %1021 = vmatprep.subr.mxu0 0.0
        %1022 = vmatpush1.msra.mxu0 0.0
        %1023 = vmatprep.subr.mxu0 0.0
        %1024 = vmatpush1.msra.mxu0 0.0
        %1025 = vmatprep.subr.mxu0 0.0
        %1026 = vmatpush1.msra.mxu0 0.0
        %1027 = vmatprep.subr.mxu0 0.0
        %1028 = vmatpush1.msra.mxu0 0.0
        %1029 = vmatprep.subr.mxu0 0.0
        %1030 = vmatpush1.msra.mxu0 0.0
        %1031 = vmatprep.subr.mxu0 0.0
        %1032 = vmatpush1.msra.mxu0 0.0
        %1033 = vmatprep.subr.mxu0 0.0
        %1034 = vmatpush1.msra.mxu0 0.0
        %1035 = vmatprep.subr.mxu0 0.0
        %1036 = vmatpush1.msra.mxu0 0.0
        %1037 = vmatprep.mubr.f32.mxu0 0.0
        %v1038 = vand.u32 %v742, 4294901760
        %v1039 = vsub.f32 %v742, %v1038
        %v1040 = vand.u32 %v1039, 4294901760
        %1041 = vmatmul.mubr.f32.gmra.mrb[0].mxu0 %v1040
        %v1042 = vpop.f32.mrb[0].mxu0
        %v1043 = vadd.f32 %v969, %v1042
        %v1044 = vpop.f32.mrb[0].mxu0
        %1045 = vdwg.mxu0
        %1046 = vmatprep.subr.mxu0 0.0
        %v1047 = vand.u32 %v744, 4294901760
        %v1048 = vsub.f32 %v744, %v1047
        %v1049 = vand.u32 %v1048, 4294901760
        %1050 = vmatpush1.msra.mxu0 %v1049
        %1051 = vmatprep.subr.mxu0 0.0
        %1052 = vmatpush1.msra.mxu0 0.0
        %1053 = vmatprep.subr.mxu0 0.0
        %1054 = vmatpush1.msra.mxu0 0.0
        %1055 = vmatprep.subr.mxu0 0.0
        %1056 = vmatpush1.msra.mxu0 0.0
        %1057 = vmatprep.subr.mxu0 0.0
        %1058 = vmatpush1.msra.mxu0 0.0
        %1059 = vmatprep.subr.mxu0 0.0
        %1060 = vmatpush1.msra.mxu0 0.0
        %1061 = vmatprep.subr.mxu0 0.0
        %1062 = vmatpush1.msra.mxu0 0.0
        %1063 = vmatprep.subr.mxu0 0.0
        %1064 = vmatpush1.msra.mxu0 0.0
        %1065 = vmatprep.subr.mxu0 0.0
        %1066 = vmatpush1.msra.mxu0 0.0
        %1067 = vmatprep.subr.mxu0 0.0
        %1068 = vmatpush1.msra.mxu0 0.0
        %1069 = vmatprep.subr.mxu0 0.0
        %1070 = vmatpush1.msra.mxu0 0.0
        %1071 = vmatprep.subr.mxu0 0.0
        %1072 = vmatpush1.msra.mxu0 0.0
        %1073 = vmatprep.subr.mxu0 0.0
        %1074 = vmatpush1.msra.mxu0 0.0
        %1075 = vmatprep.subr.mxu0 0.0
        %1076 = vmatpush1.msra.mxu0 0.0
        %1077 = vmatprep.subr.mxu0 0.0
        %1078 = vmatpush1.msra.mxu0 0.0
        %1079 = vmatprep.subr.mxu0 0.0
        %1080 = vmatpush1.msra.mxu0 0.0
        %1081 = vmatprep.subr.mxu0 0.0
        %1082 = vmatpush1.msra.mxu0 0.0
        %1083 = vmatprep.subr.mxu0 0.0
        %1084 = vmatpush1.msra.mxu0 0.0
        %1085 = vmatprep.subr.mxu0 0.0
        %1086 = vmatpush1.msra.mxu0 0.0
        %1087 = vmatprep.subr.mxu0 0.0
        %1088 = vmatpush1.msra.mxu0 0.0
        %1089 = vmatprep.subr.mxu0 0.0
        %1090 = vmatpush1.msra.mxu0 0.0
        %1091 = vmatprep.subr.mxu0 0.0
        %1092 = vmatpush1.msra.mxu0 0.0
        %1093 = vmatprep.subr.mxu0 0.0
        %1094 = vmatpush1.msra.mxu0 0.0
        %1095 = vmatprep.subr.mxu0 0.0
        %1096 = vmatpush1.msra.mxu0 0.0
        %1097 = vmatprep.subr.mxu0 0.0
        %1098 = vmatpush1.msra.mxu0 0.0
        %1099 = vmatprep.subr.mxu0 0.0
        %1100 = vmatpush1.msra.mxu0 0.0
        %1101 = vmatprep.subr.mxu0 0.0
        %1102 = vmatpush1.msra.mxu0 0.0
        %1103 = vmatprep.subr.mxu0 0.0
        %1104 = vmatpush1.msra.mxu0 0.0
        %1105 = vmatprep.subr.mxu0 0.0
        %1106 = vmatpush1.msra.mxu0 0.0
        %1107 = vmatprep.subr.mxu0 0.0
        %1108 = vmatpush1.msra.mxu0 0.0
        %1109 = vmatprep.subr.mxu0 0.0
        %1110 = vmatpush1.msra.mxu0 0.0
        %1111 = vmatprep.subr.mxu0 0.0
        %1112 = vmatpush1.msra.mxu0 0.0
        %1113 = vmatprep.mubr.f32.mxu0 0.0
        %v1114 = vand.u32 %v742, 4294901760
        %1115 = vmatmul.mubr.f32.gmra.mrb[0].mxu0 %v1114
        %v1116 = vpop.f32.mrb[0].mxu0
        %v1117 = vadd.f32 %v1043, %v1116
        %v1118 = vpop.f32.mrb[0].mxu0
        %1119 = vdwg.mxu0
        %1120 = vmatprep.subr.mxu0 0.0
        %v1121 = vand.u32 %v744, 4294901760
        %1122 = vmatpush1.msra.mxu0 %v1121
        %1123 = vmatprep.subr.mxu0 0.0
        %1124 = vmatpush1.msra.mxu0 0.0
        %1125 = vmatprep.subr.mxu0 0.0
        %1126 = vmatpush1.msra.mxu0 0.0
        %1127 = vmatprep.subr.mxu0 0.0
        %1128 = vmatpush1.msra.mxu0 0.0
        %1129 = vmatprep.subr.mxu0 0.0
        %1130 = vmatpush1.msra.mxu0 0.0
        %1131 = vmatprep.subr.mxu0 0.0
        %1132 = vmatpush1.msra.mxu0 0.0
        %1133 = vmatprep.subr.mxu0 0.0
        %1134 = vmatpush1.msra.mxu0 0.0
        %1135 = vmatprep.subr.mxu0 0.0
        %1136 = vmatpush1.msra.mxu0 0.0
        %1137 = vmatprep.subr.mxu0 0.0
        %1138 = vmatpush1.msra.mxu0 0.0
        %1139 = vmatprep.subr.mxu0 0.0
        %1140 = vmatpush1.msra.mxu0 0.0
        %1141 = vmatprep.subr.mxu0 0.0
        %1142 = vmatpush1.msra.mxu0 0.0
        %1143 = vmatprep.subr.mxu0 0.0
        %1144 = vmatpush1.msra.mxu0 0.0
        %1145 = vmatprep.subr.mxu0 0.0
        %1146 = vmatpush1.msra.mxu0 0.0
        %1147 = vmatprep.subr.mxu0 0.0
        %1148 = vmatpush1.msra.mxu0 0.0
        %1149 = vmatprep.subr.mxu0 0.0
        %1150 = vmatpush1.msra.mxu0 0.0
        %1151 = vmatprep.subr.mxu0 0.0
        %1152 = vmatpush1.msra.mxu0 0.0
        %1153 = vmatprep.subr.mxu0 0.0
        %1154 = vmatpush1.msra.mxu0 0.0
        %1155 = vmatprep.subr.mxu0 0.0
        %1156 = vmatpush1.msra.mxu0 0.0
        %1157 = vmatprep.subr.mxu0 0.0
        %1158 = vmatpush1.msra.mxu0 0.0
        %1159 = vmatprep.subr.mxu0 0.0
        %1160 = vmatpush1.msra.mxu0 0.0
        %1161 = vmatprep.subr.mxu0 0.0
        %1162 = vmatpush1.msra.mxu0 0.0
        %1163 = vmatprep.subr.mxu0 0.0
        %1164 = vmatpush1.msra.mxu0 0.0
        %1165 = vmatprep.subr.mxu0 0.0
        %1166 = vmatpush1.msra.mxu0 0.0
        %1167 = vmatprep.subr.mxu0 0.0
        %1168 = vmatpush1.msra.mxu0 0.0
        %1169 = vmatprep.subr.mxu0 0.0
        %1170 = vmatpush1.msra.mxu0 0.0
        %1171 = vmatprep.subr.mxu0 0.0
        %1172 = vmatpush1.msra.mxu0 0.0
        %1173 = vmatprep.subr.mxu0 0.0
        %1174 = vmatpush1.msra.mxu0 0.0
        %1175 = vmatprep.subr.mxu0 0.0
        %1176 = vmatpush1.msra.mxu0 0.0
        %1177 = vmatprep.subr.mxu0 0.0
        %1178 = vmatpush1.msra.mxu0 0.0
        %1179 = vmatprep.subr.mxu0 0.0
        %1180 = vmatpush1.msra.mxu0 0.0
        %1181 = vmatprep.subr.mxu0 0.0
        %1182 = vmatpush1.msra.mxu0 0.0
        %1183 = vmatprep.subr.mxu0 0.0
        %1184 = vmatpush1.msra.mxu0 0.0
        %1185 = vmatprep.mubr.f32.mxu0 0.0
        %v1186 = vand.u32 %v742, 4294901760
        %1187 = vmatmul.mubr.f32.gmra.mrb[0].mxu0 %v1186
        %v1188 = vpop.f32.mrb[0].mxu0
        %v1189 = vadd.f32 %v1117, %v1188
        %v1190 = vpop.f32.mrb[0].mxu0
        %1191 = vdwg.mxu0
        %1192 = vst [vmem:[%s265] sm:$0xf] %v1189
        %s1193 = sand.u32 %s128, 1
        %s1194 = scalar_lea.sflag [#allocation5], %s1193
        %s1195 = sand.u32 %s128, 1
        %s1196 = smul.addr %s1195, 4
        %s1197 = scalar_lea.vmem [#allocation9], %s1196
        // Predicated region
        $region45: #{tpu_custom_call.1} parent=31 // pred_check
          %p1198 = pneg %p138
        $region46: #{tpu_custom_call.1} parent=31 // pred_check_branch
          %1200 = sbr.rel (%p1198) target = $region48
        $region47: #{tpu_custom_call.1} parent=31 // pred_region
          %s1202 = ssub.s32 64, 64
          %1203 = vsyncadd %s1194, %s1202
          %s1204 = sadd.s32 %s28, %s27
          %s1205 = smul.addr %s1204, 64
          %s1206 = scalar_lea.hbm %s3, %s1205
          %s1208 = sshll.u32 %s1197, 4
          %s1209 = int_to_ptr.vmem [resolvable:$true] %s1208
          %1211 = dma.vmem_to_hbm [thread:$0]  %s1209, 64, %s1206, %s1194
        $region48: #{tpu_custom_call.1} parent=31 // pred_fallthru
          _
      $region32: #{tpu_custom_call.1} parent=5 // pred_fallthru
        _
      %p1212 = scmp.le.s32.totalorder 2, %s18
      // Predicated region
      $region49: #{tpu_custom_call.1} parent=5 // pred_check
        %p1213 = pneg %p1212
      $region50: #{tpu_custom_call.1} parent=5 // pred_check_branch
        %1215 = sbr.rel (%p1213) target = $region52
      $region51: #{tpu_custom_call.1} parent=5 // pred_region
        %s1216 = ssub.s32 %s18, 2
        // Predicated region
        $region53: #{tpu_custom_call.1} parent=51 // pred_check
          %p1217 = pneg %p144
        $region54: #{tpu_custom_call.1} parent=51 // pred_check_branch
          %1219 = sbr.rel (%p1217) target = $region56
        $region55: #{tpu_custom_call.1} parent=51 // pred_region
          %s1220 = sand.u32 %s129, 1
          %s1221 = scalar_lea.sflag [#allocation5], %s1220
          %s1222 = sand.u32 %s129, 1
          %s1223 = smul.addr %s1222, 4
          %s1224 = scalar_lea.vmem [#allocation9], %s1223
          %1225 = dma.done %s1221, 64
        $region56: #{tpu_custom_call.1} parent=51 // pred_fallthru
          _
      $region52: #{tpu_custom_call.1} parent=5 // pred_fallthru
        _
    $region6: #{tpu_custom_call.1} parent=1 // loop_footer
      %s22 = sadd.s32 1, %s18
    $region7: #{tpu_custom_call.1} parent=1 // loop_footer_branch
      %17 = sbr.rel target = $region3
    $region8: #{tpu_custom_call.1} parent=1 // loop_exit
      _
    %1226 = vsyncpa [#allocation4], 1
    %s1227 = scalar_lea.sflag [#allocation4], 1
    %1228 = vsyncpa %s1227, 1
    %1229 = vsyncpa [#allocation7], 1
    %s1230 = scalar_lea.sflag [#allocation7], 1
    %1231 = vsyncpa %s1230, 1
    %1232 = vsyncpa [#allocation5], 1
    %s1233 = scalar_lea.sflag [#allocation5], 1
    %1234 = vsyncpa %s1233, 1

</llo_original>
